<compile_context>
chip_gen: v5e
topology: v5e:2x2
jax: 0.10.0
libtpu: 0.0.40
codegen_flags: <defaults>
</compile_context>

<pallas_src>
import functools

import jax
import jax.numpy as jnp
from jax.experimental import pallas as pl
from jax.experimental.pallas import tpu as pltpu

LANE = 128  # lane width; all feature dims are zero-padded to this


def _round_up(n, m):
    return ((n + m - 1) // m) * m


def _mlp_kernel(x_ref, w_ref, b_ref, o_ref):
    # w_ref: f32 [4*128, 128]  -> W1 | W2 | W3 | W4, each zero-padded to 128x128
    # b_ref: f32 [8, 128]      -> rows 0..3 hold b1..b4 (rows 4..7 are zero pad)
    x = x_ref[...]
    w1 = w_ref[0 * LANE:1 * LANE, :]
    w2 = w_ref[1 * LANE:2 * LANE, :]
    w3 = w_ref[2 * LANE:3 * LANE, :]
    w4 = w_ref[3 * LANE:4 * LANE, :]
    b = b_ref[...]

    # fc1 -> sigmoid (exact; fc1's real output width is exactly 128, so no
    # padded output lanes exist at this layer and sigmoid(0)!=0 is irrelevant).
    h = jnp.dot(x, w1, preferred_element_type=jnp.float32) + b[0:1, :]
    h = 1.0 / (1.0 + jnp.exp(-h))

    # fc2 -> relu   (padded output lanes: 0-weight cols + 0 bias -> relu(0)=0)
    h = jnp.dot(h, w2, preferred_element_type=jnp.float32) + b[1:2, :]
    h = jnp.maximum(h, 0.0)

    # fc3 -> relu
    h = jnp.dot(h, w3, preferred_element_type=jnp.float32) + b[2:3, :]
    h = jnp.maximum(h, 0.0)

    # fc4 (no activation); lane-dense [batch_pad, 128] store, trimmed outside.
    h = jnp.dot(h, w4, preferred_element_type=jnp.float32) + b[3:4, :]
    o_ref[...] = h.astype(o_ref.dtype)


def pack_params(params):
    """Build the packed weight/bias slabs ONCE (cache and reuse every call)."""
    def pad_w(w):
        i, o = w.shape
        return jnp.pad(w, ((0, LANE - i), (0, LANE - o))).astype(jnp.float32)

    def pad_b(b):
        b2d = jnp.asarray(b).reshape(1, -1)
        return jnp.pad(b2d, ((0, 0), (0, LANE - b2d.shape[-1]))).astype(jnp.float32)

    (w1, b1), (w2, b2), (w3, b3), (w4, b4) = params
    w_slab = jnp.concatenate([pad_w(w1), pad_w(w2), pad_w(w3), pad_w(w4)], axis=0)
    b_slab = jnp.concatenate(
        [pad_b(b1), pad_b(b2), pad_b(b3), pad_b(b4),
         jnp.zeros((4, LANE), jnp.float32)], axis=0)  # pad to 8 sublane rows
    return w_slab, b_slab


@functools.partial(jax.jit, static_argnames=("out_dim",))
def mlp_forward(x, w_slab, b_slab, out_dim):
    """Run the 4-layer MLP as one Pallas kernel. x: [batch, input_size] f32."""
    batch, in_dim = x.shape
    batch_pad = max(_round_up(batch, 8), 8)  # f32 sublane tile = 8 rows

    x_p = jnp.pad(x.astype(jnp.float32),
                  ((0, batch_pad - batch), (0, LANE - in_dim)))

    vmem = pl.BlockSpec(memory_space=pltpu.MemorySpace.VMEM)
    out = pl.pallas_call(
        _mlp_kernel,
        out_shape=jax.ShapeDtypeStruct((batch_pad, LANE), jnp.float32),
        in_specs=[vmem, vmem, vmem],
        out_specs=vmem,
    )(x_p, w_slab, b_slab)
    return out[:batch, :out_dim]


def init_linear(key, in_features, out_features):
    """PyTorch-style nn.Linear init: U(-1/sqrt(in), 1/sqrt(in)).
    Returns W of shape [in, out] (pre-transposed) and b of shape [1, out], f32."""
    kw, kb = jax.random.split(key)
    bound = 1.0 / jnp.sqrt(jnp.float32(in_features))
    w = jax.random.uniform(kw, (in_features, out_features), jnp.float32,
                           minval=-bound, maxval=bound)
    b = jax.random.uniform(kb, (1, out_features), jnp.float32,
                           minval=-bound, maxval=bound)
    return w, b


def reference_forward(x, params):
    (w1, b1), (w2, b2), (w3, b3), (w4, b4) = params
    h = jax.nn.sigmoid(x @ w1 + b1)
    h = jax.nn.relu(h @ w2 + b2)
    h = jax.nn.relu(h @ w3 + b3)
    return h @ w4 + b4


if __name__ == "__main__":
    key = jax.random.PRNGKey(0)
    input_size = 16    # e.g. number of MinMax-scaled tabular features
    output_size = 4
    batch = 8

    k_x, k1, k2, k3, k4 = jax.random.split(key, 5)
    x = jax.random.uniform(k_x, (batch, input_size), jnp.float32)  # features in [0, 1]

    params = (
        init_linear(k1, input_size, 128),
        init_linear(k2, 128, 64),
        init_linear(k3, 64, 32),
        init_linear(k4, 32, output_size),
    )

    # Pack weights/biases ONCE; reuse the slabs across every forward call.
    w_slab, b_slab = pack_params(params)

    out = mlp_forward(x, w_slab, b_slab, out_dim=output_size)
    out = jax.block_until_ready(out)

    ref = reference_forward(x, params)
    assert out.shape == (batch, output_size)
    # f32 operands + exact sigmoid -> tight tolerance.
    assert jnp.allclose(out, ref, atol=1e-4, rtol=1e-4)

    print("KERNEL_OK")
</pallas_src>

<mosaic_0001>
module attributes {stable_mosaic.version = 11 : i64} {
  func.func @_mlp_kernel(%arg0: memref<8x128xf32, #tpu.memory_space<vmem>>, %arg1: memref<512x128xf32, #tpu.memory_space<vmem>>, %arg2: memref<8x128xf32, #tpu.memory_space<vmem>>, %arg3: memref<8x128xf32, #tpu.memory_space<vmem>>) attributes {dimension_semantics = [], scalar_prefetch = 0 : i64, scratch_operands = 0 : i64, tpu.core_type = #tpu.core_type<tc>} {
    %c0 = arith.constant 0 : index
    %c0_0 = arith.constant 0 : index
    %0 = vector.load %arg0[%c0, %c0_0] : memref<8x128xf32, #tpu.memory_space<vmem>>, vector<8x128xf32>
    %c0_1 = arith.constant 0 : index
    %c0_2 = arith.constant 0 : index
    %1 = vector.load %arg1[%c0_1, %c0_2] : memref<512x128xf32, #tpu.memory_space<vmem>>, vector<128x128xf32>
    %c128 = arith.constant 128 : index
    %c0_3 = arith.constant 0 : index
    %2 = vector.load %arg1[%c128, %c0_3] : memref<512x128xf32, #tpu.memory_space<vmem>>, vector<128x128xf32>
    %c256 = arith.constant 256 : index
    %c0_4 = arith.constant 0 : index
    %3 = vector.load %arg1[%c256, %c0_4] : memref<512x128xf32, #tpu.memory_space<vmem>>, vector<128x128xf32>
    %c384 = arith.constant 384 : index
    %c0_5 = arith.constant 0 : index
    %4 = vector.load %arg1[%c384, %c0_5] : memref<512x128xf32, #tpu.memory_space<vmem>>, vector<128x128xf32>
    %c0_6 = arith.constant 0 : index
    %c0_7 = arith.constant 0 : index
    %5 = vector.load %arg2[%c0_6, %c0_7] : memref<8x128xf32, #tpu.memory_space<vmem>>, vector<8x128xf32>
    %cst = arith.constant dense<0.000000e+00> : vector<8x128xf32>
    %6 = tpu.matmul %0, %1, %cst {dimension_numbers = #tpu.dot_dimension_numbers<[1], [0], [0], [1], [0, 0, 1, 1], [], []>} : vector<8x128xf32>, vector<128x128xf32>, vector<8x128xf32> -> vector<8x128xf32>
    %7 = vector.extract_strided_slice %5 {offsets = [0, 0], sizes = [1, 128], strides = [1, 1]} : vector<8x128xf32> to vector<1x128xf32>
    %8 = vector.broadcast %7 : vector<1x128xf32> to vector<8x128xf32>
    %9 = arith.addf %6, %8 : vector<8x128xf32>
    %cst_8 = arith.constant 0.000000e+00 : f32
    %10 = vector.broadcast %cst_8 : f32 to vector<8x128xf32>
    %11 = arith.subf %10, %9 : vector<8x128xf32>
    %12 = math.exp %11 : vector<8x128xf32>
    %cst_9 = arith.constant 1.000000e+00 : f32
    %13 = vector.broadcast %cst_9 : f32 to vector<8x128xf32>
    %14 = arith.addf %13, %12 : vector<8x128xf32>
    %cst_10 = arith.constant 1.000000e+00 : f32
    %15 = vector.broadcast %cst_10 : f32 to vector<8x128xf32>
    %16 = arith.divf %15, %14 : vector<8x128xf32>
    %cst_11 = arith.constant dense<0.000000e+00> : vector<8x128xf32>
    %17 = tpu.matmul %16, %2, %cst_11 {dimension_numbers = #tpu.dot_dimension_numbers<[1], [0], [0], [1], [0, 0, 1, 1], [], []>} : vector<8x128xf32>, vector<128x128xf32>, vector<8x128xf32> -> vector<8x128xf32>
    %18 = vector.extract_strided_slice %5 {offsets = [1, 0], sizes = [1, 128], strides = [1, 1]} : vector<8x128xf32> to vector<1x128xf32>
    %19 = vector.broadcast %18 : vector<1x128xf32> to vector<8x128xf32>
    %20 = arith.addf %17, %19 : vector<8x128xf32>
    %cst_12 = arith.constant 0.000000e+00 : f32
    %21 = vector.broadcast %cst_12 : f32 to vector<8x128xf32>
    %22 = arith.maximumf %20, %21 : vector<8x128xf32>
    %cst_13 = arith.constant dense<0.000000e+00> : vector<8x128xf32>
    %23 = tpu.matmul %22, %3, %cst_13 {dimension_numbers = #tpu.dot_dimension_numbers<[1], [0], [0], [1], [0, 0, 1, 1], [], []>} : vector<8x128xf32>, vector<128x128xf32>, vector<8x128xf32> -> vector<8x128xf32>
    %24 = vector.extract_strided_slice %5 {offsets = [2, 0], sizes = [1, 128], strides = [1, 1]} : vector<8x128xf32> to vector<1x128xf32>
    %25 = vector.broadcast %24 : vector<1x128xf32> to vector<8x128xf32>
    %26 = arith.addf %23, %25 : vector<8x128xf32>
    %cst_14 = arith.constant 0.000000e+00 : f32
    %27 = vector.broadcast %cst_14 : f32 to vector<8x128xf32>
    %28 = arith.maximumf %26, %27 : vector<8x128xf32>
    %cst_15 = arith.constant dense<0.000000e+00> : vector<8x128xf32>
    %29 = tpu.matmul %28, %4, %cst_15 {dimension_numbers = #tpu.dot_dimension_numbers<[1], [0], [0], [1], [0, 0, 1, 1], [], []>} : vector<8x128xf32>, vector<128x128xf32>, vector<8x128xf32> -> vector<8x128xf32>
    %30 = vector.extract_strided_slice %5 {offsets = [3, 0], sizes = [1, 128], strides = [1, 1]} : vector<8x128xf32> to vector<1x128xf32>
    %31 = vector.broadcast %30 : vector<1x128xf32> to vector<8x128xf32>
    %32 = arith.addf %29, %31 : vector<8x128xf32>
    %c0_16 = arith.constant 0 : index
    %c0_17 = arith.constant 0 : index
    %33 = vector.load %arg3[%c0_16, %c0_17] : memref<8x128xf32, #tpu.memory_space<vmem>>, vector<8x128xf32>
    tpu.vector_store %arg3[%c0_16, %c0_17], %32 {strides = array<i32>} : memref<8x128xf32, #tpu.memory_space<vmem>>, vector<8x128xf32>,
    return
  }
}

</mosaic_0001>

<llo_original>
// kernel: mlp_forward.1
$region0: #{mlp_forward.1}
  #allocation0 [shape = 'u32[]', space=smem, size = 0x4, offset = 0x4, fixed_abs, tag = 'smem constant byte address 0x4 - core index']
  #allocation1 [shape = 'u32[72,128]{1,0:T(1,128)}', space=vmem, size = 0x9000, scoped, tag = 'internal scratch']
  %s0 = inlined_call_operand.vmem [shape: f32[8,128], index: 0, kind: input, shape index: {}]
  %s1 = inlined_call_operand.hbm [shape: f32[512,128], index: 1, kind: input, shape index: {}]
  %s2 = inlined_call_operand.vmem [shape: f32[8,128], index: 2, kind: input, shape index: {}]
  %s3 = inlined_call_operand.vmem [shape: f32[8,128], index: 3, kind: output, shape index: {}]
  %s4 = sld [smem:[#allocation0]]
  $region26: #{mlp_forward.1} parent=0
    _
  %s6 = ssub.s32 1, %s4
  %s7 = scalar_select 0, %s6, %s4
  $region1: #{mlp_forward.1} parent=0
    #allocation2 [shape = 'u8[262144]{0}', space=vmem, size = 0x40000, scoped, tag = 'input window, operand 1, single buffered']
    #allocation3 [shape = 's32[1]{0}', space=sflag, size = 0x4, scoped, tag = 'scoped memory for mlp_forward.1']
    %8 = vsyncpa [#allocation3], 0
    // Predicated region
    $region2: #{mlp_forward.1} parent=1 // pred_check
      _
    $region3: #{mlp_forward.1} parent=1 // pred_check_branch
      %10 = sbr.rel (0) target = $region5
    $region4: #{mlp_forward.1} parent=1 // pred_region
      _
    $region5: #{mlp_forward.1} parent=1 // pred_fallthru
      _
    // Predicated region
    $region6: #{mlp_forward.1} parent=1 // pred_check
      _
    $region7: #{mlp_forward.1} parent=1 // pred_check_branch
      %12 = sbr.rel (0) target = $region9
    $region8: #{mlp_forward.1} parent=1 // pred_region
      %14 = vsyncadd [#allocation3], 0
      %s15 = sshll.u32 %s1, 4
      %s16 = int_to_ptr.hbm [resolvable:$true] %s15
      %s17 = sshll.u32 [#allocation2], 4
      %s18 = int_to_ptr.vmem [resolvable:$true] %s17
      %23 = dma.hbm_to_vmem [thread:$0]  %s16, 8192, %s18, [#allocation3], 128, 128, 8
    $region9: #{mlp_forward.1} parent=1 // pred_fallthru
      _
    // Predicated region
    $region10: #{mlp_forward.1} parent=1 // pred_check
      _
    $region11: #{mlp_forward.1} parent=1 // pred_check_branch
      %25 = sbr.rel (0) target = $region13
    $region12: #{mlp_forward.1} parent=1 // pred_region
      _
    $region13: #{mlp_forward.1} parent=1 // pred_fallthru
      _
    // Predicated region
    $region14: #{mlp_forward.1} parent=1 // pred_check
      _
    $region15: #{mlp_forward.1} parent=1 // pred_check_branch
      %27 = sbr.rel (0) target = $region17
    $region16: #{mlp_forward.1} parent=1 // pred_region
      %29 = dma.done [#allocation3], 8192
    $region17: #{mlp_forward.1} parent=1 // pred_fallthru
      _
    %v30 = vld [vmem:[%s0] sm:$0xff]
    %v31 = vld [vmem:[#allocation2] sm:$0xff]
    %v32 = vld [vmem:[#allocation2 + $0x8] sm:$0xff]
    %v33 = vld [vmem:[#allocation2 + $0x10] sm:$0xff]
    %v34 = vld [vmem:[#allocation2 + $0x18] sm:$0xff]
    %v35 = vld [vmem:[#allocation2 + $0x20] sm:$0xff]
    %v36 = vld [vmem:[#allocation2 + $0x28] sm:$0xff]
    %v37 = vld [vmem:[#allocation2 + $0x30] sm:$0xff]
    %v38 = vld [vmem:[#allocation2 + $0x38] sm:$0xff]
    %v39 = vld [vmem:[#allocation2 + $0x40] sm:$0xff]
    %v40 = vld [vmem:[#allocation2 + $0x48] sm:$0xff]
    %v41 = vld [vmem:[#allocation2 + $0x50] sm:$0xff]
    %v42 = vld [vmem:[#allocation2 + $0x58] sm:$0xff]
    %v43 = vld [vmem:[#allocation2 + $0x60] sm:$0xff]
    %v44 = vld [vmem:[#allocation2 + $0x68] sm:$0xff]
    %v45 = vld [vmem:[#allocation2 + $0x70] sm:$0xff]
    %v46 = vld [vmem:[#allocation2 + $0x78] sm:$0xff]
    %v47 = vld [vmem:[#allocation2 + $0x80] sm:$0xff]
    %v48 = vld [vmem:[#allocation2 + $0x88] sm:$0xff]
    %v49 = vld [vmem:[#allocation2 + $0x90] sm:$0xff]
    %v50 = vld [vmem:[#allocation2 + $0x98] sm:$0xff]
    %v51 = vld [vmem:[#allocation2 + $0xa0] sm:$0xff]
    %v52 = vld [vmem:[#allocation2 + $0xa8] sm:$0xff]
    %v53 = vld [vmem:[#allocation2 + $0xb0] sm:$0xff]
    %v54 = vld [vmem:[#allocation2 + $0xb8] sm:$0xff]
    %v55 = vld [vmem:[#allocation2 + $0xc0] sm:$0xff]
    %v56 = vld [vmem:[#allocation2 + $0xc8] sm:$0xff]
    %v57 = vld [vmem:[#allocation2 + $0xd0] sm:$0xff]
    %v58 = vld [vmem:[#allocation2 + $0xd8] sm:$0xff]
    %v59 = vld [vmem:[#allocation2 + $0xe0] sm:$0xff]
    %v60 = vld [vmem:[#allocation2 + $0xe8] sm:$0xff]
    %v61 = vld [vmem:[#allocation2 + $0xf0] sm:$0xff]
    %v62 = vld [vmem:[#allocation2 + $0xf8] sm:$0xff]
    %v63 = vld [vmem:[#allocation2 + $0x100] sm:$0xff]
    %v64 = vld [vmem:[#allocation2 + $0x108] sm:$0xff]
    %v65 = vld [vmem:[#allocation2 + $0x110] sm:$0xff]
    %v66 = vld [vmem:[#allocation2 + $0x118] sm:$0xff]
    %v67 = vld [vmem:[#allocation2 + $0x120] sm:$0xff]
    %v68 = vld [vmem:[#allocation2 + $0x128] sm:$0xff]
    %v69 = vld [vmem:[#allocation2 + $0x130] sm:$0xff]
    %v70 = vld [vmem:[#allocation2 + $0x138] sm:$0xff]
    %v71 = vld [vmem:[#allocation2 + $0x140] sm:$0xff]
    %v72 = vld [vmem:[#allocation2 + $0x148] sm:$0xff]
    %v73 = vld [vmem:[#allocation2 + $0x150] sm:$0xff]
    %v74 = vld [vmem:[#allocation2 + $0x158] sm:$0xff]
    %v75 = vld [vmem:[#allocation2 + $0x160] sm:$0xff]
    %v76 = vld [vmem:[#allocation2 + $0x168] sm:$0xff]
    %v77 = vld [vmem:[#allocation2 + $0x170] sm:$0xff]
    %v78 = vld [vmem:[#allocation2 + $0x178] sm:$0xff]
    %v79 = vld [vmem:[#allocation2 + $0x180] sm:$0xff]
    %v80 = vld [vmem:[#allocation2 + $0x188] sm:$0xff]
    %v81 = vld [vmem:[#allocation2 + $0x190] sm:$0xff]
    %v82 = vld [vmem:[#allocation2 + $0x198] sm:$0xff]
    %v83 = vld [vmem:[#allocation2 + $0x1a0] sm:$0xff]
    %v84 = vld [vmem:[#allocation2 + $0x1a8] sm:$0xff]
    %v85 = vld [vmem:[#allocation2 + $0x1b0] sm:$0xff]
    %v86 = vld [vmem:[#allocation2 + $0x1b8] sm:$0xff]
    %v87 = vld [vmem:[#allocation2 + $0x1c0] sm:$0xff]
    %v88 = vld [vmem:[#allocation2 + $0x1c8] sm:$0xff]
    %v89 = vld [vmem:[#allocation2 + $0x1d0] sm:$0xff]
    %v90 = vld [vmem:[#allocation2 + $0x1d8] sm:$0xff]
    %v91 = vld [vmem:[#allocation2 + $0x1e0] sm:$0xff]
    %v92 = vld [vmem:[#allocation2 + $0x1e8] sm:$0xff]
    %v93 = vld [vmem:[#allocation2 + $0x1f0] sm:$0xff]
    %v94 = vld [vmem:[#allocation2 + $0x1f8] sm:$0xff]
    %v95 = vld [vmem:[%s2] sm:$0xff]
    %v96 = vperm.slane %v95, 0
    %97 = vmatpush.msra.mxu0 %v46
    %98 = vmatpush.msra.mxu0 %v45
    %99 = vmatpush.msra.mxu0 %v44
    %100 = vmatpush.msra.mxu0 %v43
    %101 = vmatpush.msra.mxu0 %v42
    %102 = vmatpush.msra.mxu0 %v41
    %103 = vmatpush.msra.mxu0 %v40
    %104 = vmatpush.msra.mxu0 %v39
    %105 = vmatpush.msra.mxu0 %v38
    %106 = vmatpush.msra.mxu0 %v37
    %107 = vmatpush.msra.mxu0 %v36
    %108 = vmatpush.msra.mxu0 %v35
    %109 = vmatpush.msra.mxu0 %v34
    %110 = vmatpush.msra.mxu0 %v33
    %111 = vmatpush.msra.mxu0 %v32
    %112 = vmatpush.msra.mxu0 %v31
    %113 = vmatmul.f32.gmra.mxu0 %v30
    %v114 = vpop.f32.mrf.mxu0
    %v115 = vadd.f32 %v96, %v114
    %116 = vdwg.mxu0
    %v117 = vsub.f32 0.0, %v115
    %v118 = vmul.f32 %v117, 1.442695
    %v119 = vpow.pop %v118
    %v120 = vadd.f32 %v119, 1.0
    %v121 = vrcp.pop %v120
    %v122 = vmul.f32 %v120, %v121
    %v123 = vsub.f32 1.0, %v122
    %v124 = vmul.f32 %v121, %v123
    %v125 = vadd.f32 %v121, %v124
    %vm126 = vweird.f32 %v120
    %vm127 = vweird.f32 %v121
    %vm128 = vmor %vm126, %vm127
    %v129 = vsel %vm128, %v121, %v125
    %v130 = vand.u32 2147483647, %v120
    %vm131 = vcmp.eq.f32.partialorder %v130, 8.507059e+37
    %v132 = vand.u32 %v120, 2147483648
    %v133 = vor.u32 1.1754944e-38, %v132
    %v134 = vsel %vm131, %v133, %v129
    %v135 = vmul.f32 1.0, %v134
    %v136 = vperm.slane %v95, 1
    %137 = vmatpush.msra.mxu0 %v62
    %138 = vmatpush.msra.mxu0 %v61
    %139 = vmatpush.msra.mxu0 %v60
    %140 = vmatpush.msra.mxu0 %v59
    %141 = vmatpush.msra.mxu0 %v58
    %142 = vmatpush.msra.mxu0 %v57
    %143 = vmatpush.msra.mxu0 %v56
    %144 = vmatpush.msra.mxu0 %v55
    %145 = vmatpush.msra.mxu0 %v54
    %146 = vmatpush.msra.mxu0 %v53
    %147 = vmatpush.msra.mxu0 %v52
    %148 = vmatpush.msra.mxu0 %v51
    %149 = vmatpush.msra.mxu0 %v50
    %150 = vmatpush.msra.mxu0 %v49
    %151 = vmatpush.msra.mxu0 %v48
    %152 = vmatpush.msra.mxu0 %v47
    %153 = vmatmul.f32.gmra.mxu0 %v135
    %v154 = vpop.f32.mrf.mxu0
    %v155 = vadd.f32 %v136, %v154
    %156 = vdwg.mxu0
    %v157 = vmax.f32 %v155, 0.0
    %v158 = vperm.slane %v95, 2
    %159 = vmatpush.msra.mxu0 %v78
    %160 = vmatpush.msra.mxu0 %v77
    %161 = vmatpush.msra.mxu0 %v76
    %162 = vmatpush.msra.mxu0 %v75
    %163 = vmatpush.msra.mxu0 %v74
    %164 = vmatpush.msra.mxu0 %v73
    %165 = vmatpush.msra.mxu0 %v72
    %166 = vmatpush.msra.mxu0 %v71
    %167 = vmatpush.msra.mxu0 %v70
    %168 = vmatpush.msra.mxu0 %v69
    %169 = vmatpush.msra.mxu0 %v68
    %170 = vmatpush.msra.mxu0 %v67
    %171 = vmatpush.msra.mxu0 %v66
    %172 = vmatpush.msra.mxu0 %v65
    %173 = vmatpush.msra.mxu0 %v64
    %174 = vmatpush.msra.mxu0 %v63
    %175 = vmatmul.f32.gmra.mxu0 %v157
    %v176 = vpop.f32.mrf.mxu0
    %v177 = vadd.f32 %v158, %v176
    %178 = vdwg.mxu0
    %v179 = vmax.f32 %v177, 0.0
    %v180 = vperm.slane %v95, 3
    %181 = vmatpush.msra.mxu0 %v94
    %182 = vmatpush.msra.mxu0 %v93
    %183 = vmatpush.msra.mxu0 %v92
    %184 = vmatpush.msra.mxu0 %v91
    %185 = vmatpush.msra.mxu0 %v90
    %186 = vmatpush.msra.mxu0 %v89
    %187 = vmatpush.msra.mxu0 %v88
    %188 = vmatpush.msra.mxu0 %v87
    %189 = vmatpush.msra.mxu0 %v86
    %190 = vmatpush.msra.mxu0 %v85
    %191 = vmatpush.msra.mxu0 %v84
    %192 = vmatpush.msra.mxu0 %v83
    %193 = vmatpush.msra.mxu0 %v82
    %194 = vmatpush.msra.mxu0 %v81
    %195 = vmatpush.msra.mxu0 %v80
    %196 = vmatpush.msra.mxu0 %v79
    %197 = vmatmul.f32.gmra.mxu0 %v179
    %v198 = vpop.f32.mrf.mxu0
    %v199 = vadd.f32 %v180, %v198
    %200 = vdwg.mxu0
    %201 = vst [vmem:[%s3] sm:$0xff] %v199
    // Predicated region
    $region18: #{mlp_forward.1} parent=1 // pred_check
      _
    $region19: #{mlp_forward.1} parent=1 // pred_check_branch
      %203 = sbr.rel (0) target = $region21
    $region20: #{mlp_forward.1} parent=1 // pred_region
      _
    $region21: #{mlp_forward.1} parent=1 // pred_fallthru
      _
    // Predicated region
    $region22: #{mlp_forward.1} parent=1 // pred_check
      _
    $region23: #{mlp_forward.1} parent=1 // pred_check_branch
      %205 = sbr.rel (0) target = $region25
    $region24: #{mlp_forward.1} parent=1 // pred_region
      _
    $region25: #{mlp_forward.1} parent=1 // pred_fallthru
      _
    %206 = vsyncpa [#allocation3], 1

</llo_original>
